<compile_context>
chip_gen: v7x
topology: tpu7x:2x2x1
jax: 0.10.0
libtpu: 0.0.40
codegen_flags: <defaults>
</compile_context>

<pallas_src>
import functools

import jax
import jax.numpy as jnp
from jax.experimental import pallas as pl
from jax.experimental.pallas import tpu as pltpu  # noqa: F401  (kept for TPU-specific tuning hooks)


def attn_kernel(q_ref, k_ref, v_ref,
                wq_ref, bq_ref, wk_ref, bk_ref,
                wv_ref, bv_ref, wo_ref, bo_ref,
                *rest, dk_scale, drop_mode):
    """Single-invocation batched attention over all B*H heads.

    q_ref: (BH, Lq, Din), k_ref/v_ref: (BH, Lk, Din), weights stored (in, out).
    drop_mode in {"none", "zero", "mask"} is resolved at trace time.
    """
    if drop_mode == "mask":
        mask_ref, out_ref = rest          # mask: (BH, Lq, Lk), pre-scaled by 1/(1-p)
    else:
        (out_ref,) = rest

    if drop_mode == "zero":
        # dropout(p >= 1) zeroes the attention weights exactly, so
        # output = zeros @ v @ Wo + bo = bo broadcast. Skip all dead work.
        out_ref[...] = jnp.broadcast_to(bo_ref[...], out_ref.shape).astype(out_ref.dtype)
        return

    q_in = q_ref[...]   # (BH, Lq, Din) f32
    k_in = k_ref[...]   # (BH, Lk, Din)
    v_in = v_ref[...]   # (BH, Lk, Din)

    # Linear projections (shared weights across the batched leading dim).
    q = jnp.einsum('bld,df->blf', q_in, wq_ref[...],
                   preferred_element_type=jnp.float32) + bq_ref[...]
    k = jnp.einsum('bld,df->blf', k_in, wk_ref[...],
                   preferred_element_type=jnp.float32) + bk_ref[...]
    v = jnp.einsum('bld,df->blf', v_in, wv_ref[...],
                   preferred_element_type=jnp.float32) + bv_ref[...]

    # Scaled attention logits; contract last dims directly (no explicit k.T).
    qk = jnp.einsum('bqd,bkd->bqk', q, k,
                    preferred_element_type=jnp.float32) * dk_scale   # (BH, Lq, Lk)

    # Softmax along the last axis.
    m = jnp.max(qk, axis=-1, keepdims=True)
    e = jnp.exp(qk - m)
    softmax_qk = e / jnp.sum(e, axis=-1, keepdims=True)

    # Dropout (trace-time specialized).
    if drop_mode == "mask":
        drop_qk = softmax_qk * mask_ref[...]
    else:  # "none"
        drop_qk = softmax_qk

    # Attention output + final projection.
    attn = jnp.einsum('bqk,bkd->bqd', drop_qk, v,
                      preferred_element_type=jnp.float32)            # (BH, Lq, Dv)
    out = jnp.einsum('bqd,df->bqf', attn, wo_ref[...],
                     preferred_element_type=jnp.float32) + bo_ref[...]
    out_ref[...] = out.astype(out_ref.dtype)


def model_forward(query, key, value, dropout_p, params, rng_key=None):
    """query: (B,H,Lq,Din), key/value: (B,H,Lk,Din). Returns (B,H,Lq,Dout)."""
    wq, bq, wk, bk, wv, bv, wo, bo = params
    B, H, Lq, Din = query.shape
    Lk = key.shape[2]
    Dq = wq.shape[1]
    Dout = wo.shape[1]
    BH = B * H

    # dk = q.size(2) * q.size(3) / key.size(2) * key.size(-1) ** (-0.5)
    dk_scale = float(Lq * Dq / Lk * (Din ** -0.5))

    qf = query.reshape(BH, Lq, Din)
    kf = key.reshape(BH, Lk, Din)
    vf = value.reshape(BH, Lk, Din)

    p = float(dropout_p)
    if p >= 1.0:
        drop_mode = "zero"
        extra = ()
    elif p <= 0.0:
        drop_mode = "none"
        extra = ()
    else:
        drop_mode = "mask"
        if rng_key is None:
            rng_key = jax.random.PRNGKey(0)
        keep = jax.random.bernoulli(rng_key, 1.0 - p, (BH, Lq, Lk))
        extra = (keep.astype(jnp.float32) * (1.0 / (1.0 - p)),)

    kernel = functools.partial(attn_kernel, dk_scale=dk_scale, drop_mode=drop_mode)
    # Single grid step: everything (activations + weights, a few KB) lives in
    # VMEM for one kernel invocation; default whole-array BlockSpecs suffice.
    out = pl.pallas_call(
        kernel,
        out_shape=jax.ShapeDtypeStruct((BH, Lq, Dout), query.dtype),
    )(qf, kf, vf, wq, bq, wk, bk, wv, bv, wo, bo, *extra)
    return out.reshape(B, H, Lq, Dout)


def init_params(key, Din=10, Dq=5, Dv=6, Dout=10):
    """Deterministic PyTorch-style Linear init; weights stored as (in, out)."""
    def linear(k, fan_in, fan_out):
        kw, kb = jax.random.split(k)
        bound = 1.0 / (fan_in ** 0.5)
        w = jax.random.uniform(kw, (fan_in, fan_out), jnp.float32, -bound, bound)
        b = jax.random.uniform(kb, (1, fan_out), jnp.float32, -bound, bound)
        return w, b

    k1, k2, k3, k4 = jax.random.split(key, 4)
    wq, bq = linear(k1, Din, Dq)
    wk, bk = linear(k2, Din, Dq)   # fixed: 5 (not 4) so q @ k^T is valid
    wv, bv = linear(k3, Din, Dv)
    wo, bo = linear(k4, Dv, Dout)
    return (wq, bq, wk, bk, wv, bv, wo, bo)


def reference_forward(query, key, value, dropout_p, params):
    """Pure-JAX reference (exact for dropout_p >= 1 and dropout_p == 0)."""
    wq, bq, wk, bk, wv, bv, wo, bo = params
    Lq = query.shape[2]
    Lk = key.shape[2]
    Din = key.shape[-1]
    q = query @ wq + bq
    k = key @ wk + bk
    v = value @ wv + bv
    dk = Lq * q.shape[-1] / Lk * (Din ** -0.5)
    qk = jnp.einsum("bhqd,bhkd->bhqk", q, k) * dk
    sm = jax.nn.softmax(qk, axis=-1)
    if dropout_p >= 1.0:
        drop = jnp.zeros_like(sm)
    else:
        drop = sm / (1.0 - dropout_p)   # expectation-exact only for p == 0
    out = jnp.einsum("bhqk,bhkd->bhqd", drop, v)
    return out @ wo + bo


if __name__ == "__main__":
    B, H, Lq, Lk, Din = 3, 2, 4, 8, 10
    dropout_p = 1.0   # as in the original script's module-level dropout_p = 1

    root = jax.random.PRNGKey(0)
    kp, kq, kk, kv = jax.random.split(root, 4)
    params = init_params(kp, Din=Din, Dq=5, Dv=6, Dout=10)
    query = jax.random.normal(kq, (B, H, Lq, Din), jnp.float32)
    key = jax.random.normal(kk, (B, H, Lk, Din), jnp.float32)
    value = jax.random.normal(kv, (B, H, Lk, Din), jnp.float32)

    # Shipped config: p = 1 (dropout zeroes everything -> output == bo broadcast).
    out = model_forward(query, key, value, dropout_p, params)
    out = jax.block_until_ready(out)
    ref = reference_forward(query, key, value, dropout_p, params)
    assert out.shape == (B, H, Lq, 10), out.shape
    assert jnp.allclose(out, ref, atol=1e-5, rtol=1e-5), "mismatch vs reference (p=1)"

    # Exercise the full attention path exactly (p = 0 -> dropout is identity).
    out0 = jax.block_until_ready(model_forward(query, key, value, 0.0, params))
    ref0 = reference_forward(query, key, value, 0.0, params)
    assert jnp.allclose(out0, ref0, atol=1e-5, rtol=1e-5), "mismatch vs reference (p=0)"

    print("KERNEL_OK")
</pallas_src>

<mosaic_0001>
module attributes {stable_mosaic.version = 11 : i64} {
  func.func @attn_kernel(%arg0: memref<6x4x10xf32, #tpu.memory_space<vmem>>, %arg1: memref<6x8x10xf32, #tpu.memory_space<vmem>>, %arg2: memref<6x8x10xf32, #tpu.memory_space<vmem>>, %arg3: memref<10x5xf32, #tpu.memory_space<vmem>>, %arg4: memref<1x5xf32, #tpu.memory_space<vmem>>, %arg5: memref<10x5xf32, #tpu.memory_space<vmem>>, %arg6: memref<1x5xf32, #tpu.memory_space<vmem>>, %arg7: memref<10x6xf32, #tpu.memory_space<vmem>>, %arg8: memref<1x6xf32, #tpu.memory_space<vmem>>, %arg9: memref<6x10xf32, #tpu.memory_space<vmem>>, %arg10: memref<1x10xf32, #tpu.memory_space<vmem>>, %arg11: memref<6x4x10xf32, #tpu.memory_space<vmem>>) attributes {dimension_semantics = [], scalar_prefetch = 0 : i64, scratch_operands = 0 : i64, tpu.core_type = #tpu.core_type<tc>} {
    %c0 = arith.constant 0 : index
    %c0_0 = arith.constant 0 : index
    %0 = vector.load %arg10[%c0, %c0_0] : memref<1x10xf32, #tpu.memory_space<vmem>>, vector<1x10xf32>
    %1 = vector.shape_cast %0 : vector<1x10xf32> to vector<1x1x10xf32>
    %2 = vector.broadcast %1 : vector<1x1x10xf32> to vector<6x4x10xf32>
    %c0_1 = arith.constant 0 : index
    %c0_2 = arith.constant 0 : index
    %c0_3 = arith.constant 0 : index
    %3 = vector.load %arg11[%c0_1, %c0_2, %c0_3] : memref<6x4x10xf32, #tpu.memory_space<vmem>>, vector<6x4x10xf32>
    tpu.vector_store %arg11[%c0_1, %c0_2, %c0_3], %2 {strides = array<i32>} : memref<6x4x10xf32, #tpu.memory_space<vmem>>, vector<6x4x10xf32>,
    return
  }
}

</mosaic_0001>

<llo_original>
// kernel: tpu_custom_call.1
$region0: #{tpu_custom_call.1}
  #allocation0 [shape = 'u32[]', space=smem, size = 0x4, offset = 0x4, fixed_abs, tag = 'smem constant byte address 0x4 - core index']
  #allocation1 [shape = 'u32[144,128]{1,0:T(1,128)}', space=vmem, size = 0x12000, scoped, tag = 'internal scratch']
  %s0 = inlined_call_operand.vmem [shape: f32[6,4,10], index: 0, kind: input, shape index: {}]
  %s1 = inlined_call_operand.vmem [shape: f32[6,8,10], index: 1, kind: input, shape index: {}]
  %s2 = inlined_call_operand.hbm [shape: f32[6,8,10], index: 2, kind: input, shape index: {}]
  %s3 = inlined_call_operand.vmem [shape: f32[10,5], index: 3, kind: input, shape index: {}]
  %s4 = inlined_call_operand.vmem [shape: f32[1,5], index: 4, kind: input, shape index: {}]
  %s5 = inlined_call_operand.vmem [shape: f32[10,5], index: 5, kind: input, shape index: {}]
  %s6 = inlined_call_operand.vmem [shape: f32[1,5], index: 6, kind: input, shape index: {}]
  %s7 = inlined_call_operand.vmem [shape: f32[10,6], index: 7, kind: input, shape index: {}]
  %s8 = inlined_call_operand.hbm [shape: f32[1,6], index: 8, kind: input, shape index: {}]
  %s9 = inlined_call_operand.vmem [shape: f32[6,10], index: 9, kind: input, shape index: {}]
  %s10 = inlined_call_operand.vmem [shape: f32[1,10], index: 10, kind: input, shape index: {}]
  %s11 = inlined_call_operand.hbm [shape: f32[6,4,10], index: 11, kind: output, shape index: {}]
  %s12 = sld [smem:[#allocation0]]
  $region62: #{tpu_custom_call.1} parent=0
    _
  %s14 = ssub.s32 1, %s12
  %s15 = scalar_select 0, %s14, %s12
  $region1: #{tpu_custom_call.1} parent=0
    #allocation2 [shape = 'u8[24576]{0}', space=vmem, size = 0x6000, scoped, tag = 'input window, operand 2, single buffered']
    #allocation3 [shape = 's32[1]{0}', space=sflag, size = 0x4, scoped, tag = 'scoped memory for tpu_custom_call.1']
    #allocation4 [shape = 's32[1]{0}', space=sflag, size = 0x4, scoped, tag = 'scoped memory for tpu_custom_call.1']
    #allocation5 [shape = 'u8[512]{0}', space=vmem, size = 0x400, scoped, tag = 'input window, operand 8, single buffered']
    #allocation6 [shape = 's32[1]{0}', space=sflag, size = 0x4, scoped, tag = 'scoped memory for tpu_custom_call.1']
    #allocation7 [shape = 'u8[12288]{0}', space=vmem, size = 0x3000, scoped, tag = 'output window, operand 0, single buffered']
    %16 = vsyncpa [#allocation3], 0
    %17 = vsyncpa [#allocation6], 0
    %18 = vsyncpa [#allocation4], 0
    // Predicated region
    $region2: #{tpu_custom_call.1} parent=1 // pred_check
      _
    $region3: #{tpu_custom_call.1} parent=1 // pred_check_branch
      %20 = sbr.rel (0) target = $region5
    $region4: #{tpu_custom_call.1} parent=1 // pred_region
      _
    $region5: #{tpu_custom_call.1} parent=1 // pred_fallthru
      _
    // Predicated region
    $region6: #{tpu_custom_call.1} parent=1 // pred_check
      _
    $region7: #{tpu_custom_call.1} parent=1 // pred_check_branch
      %22 = sbr.rel (0) target = $region9
    $region8: #{tpu_custom_call.1} parent=1 // pred_region
      _
    $region9: #{tpu_custom_call.1} parent=1 // pred_fallthru
      _
    // Predicated region
    $region10: #{tpu_custom_call.1} parent=1 // pred_check
      _
    $region11: #{tpu_custom_call.1} parent=1 // pred_check_branch
      %24 = sbr.rel (0) target = $region13
    $region12: #{tpu_custom_call.1} parent=1 // pred_region
      %s26 = ssub.s32 768, 768
      %27 = vsyncadd [#allocation3], %s26
      %s28 = sshll.u32 [#allocation2], 4
      %s29 = int_to_ptr.vmem [resolvable:$true] %s28
      %34 = dma.hbm_to_vmem [thread:$0]  %s2, 768, %s29, [#allocation3], 128, 128, 8
    $region13: #{tpu_custom_call.1} parent=1 // pred_fallthru
      _
    // Predicated region
    $region14: #{tpu_custom_call.1} parent=1 // pred_check
      _
    $region15: #{tpu_custom_call.1} parent=1 // pred_check_branch
      %36 = sbr.rel (0) target = $region17
    $region16: #{tpu_custom_call.1} parent=1 // pred_region
      _
    $region17: #{tpu_custom_call.1} parent=1 // pred_fallthru
      _
    // Predicated region
    $region18: #{tpu_custom_call.1} parent=1 // pred_check
      _
    $region19: #{tpu_custom_call.1} parent=1 // pred_check_branch
      %38 = sbr.rel (0) target = $region21
    $region20: #{tpu_custom_call.1} parent=1 // pred_region
      _
    $region21: #{tpu_custom_call.1} parent=1 // pred_fallthru
      _
    // Predicated region
    $region22: #{tpu_custom_call.1} parent=1 // pred_check
      _
    $region23: #{tpu_custom_call.1} parent=1 // pred_check_branch
      %40 = sbr.rel (0) target = $region25
    $region24: #{tpu_custom_call.1} parent=1 // pred_region
      _
    $region25: #{tpu_custom_call.1} parent=1 // pred_fallthru
      _
    // Predicated region
    $region26: #{tpu_custom_call.1} parent=1 // pred_check
      _
    $region27: #{tpu_custom_call.1} parent=1 // pred_check_branch
      %42 = sbr.rel (0) target = $region29
    $region28: #{tpu_custom_call.1} parent=1 // pred_region
      _
    $region29: #{tpu_custom_call.1} parent=1 // pred_fallthru
      _
    // Predicated region
    $region30: #{tpu_custom_call.1} parent=1 // pred_check
      _
    $region31: #{tpu_custom_call.1} parent=1 // pred_check_branch
      %44 = sbr.rel (0) target = $region33
    $region32: #{tpu_custom_call.1} parent=1 // pred_region
      _
    $region33: #{tpu_custom_call.1} parent=1 // pred_fallthru
      _
    // Predicated region
    $region34: #{tpu_custom_call.1} parent=1 // pred_check
      _
    $region35: #{tpu_custom_call.1} parent=1 // pred_check_branch
      %46 = sbr.rel (0) target = $region37
    $region36: #{tpu_custom_call.1} parent=1 // pred_region
      %s48 = ssub.s32 16, 16
      %49 = vsyncadd [#allocation6], %s48
      %s51 = sshll.u32 [#allocation5], 4
      %s52 = int_to_ptr.vmem [resolvable:$true] %s51
      %54 = dma.hbm_to_vmem [thread:$0]  %s8, 16, %s52, [#allocation6]
    $region37: #{tpu_custom_call.1} parent=1 // pred_fallthru
      _
    // Predicated region
    $region38: #{tpu_custom_call.1} parent=1 // pred_check
      _
    $region39: #{tpu_custom_call.1} parent=1 // pred_check_branch
      %56 = sbr.rel (0) target = $region41
    $region40: #{tpu_custom_call.1} parent=1 // pred_region
      _
    $region41: #{tpu_custom_call.1} parent=1 // pred_fallthru
      _
    // Predicated region
    $region42: #{tpu_custom_call.1} parent=1 // pred_check
      _
    $region43: #{tpu_custom_call.1} parent=1 // pred_check_branch
      %58 = sbr.rel (0) target = $region45
    $region44: #{tpu_custom_call.1} parent=1 // pred_region
      _
    $region45: #{tpu_custom_call.1} parent=1 // pred_fallthru
      _
    // Predicated region
    $region46: #{tpu_custom_call.1} parent=1 // pred_check
      _
    $region47: #{tpu_custom_call.1} parent=1 // pred_check_branch
      %60 = sbr.rel (0) target = $region49
    $region48: #{tpu_custom_call.1} parent=1 // pred_region
      %61 = dma.done [#allocation3], 768
    $region49: #{tpu_custom_call.1} parent=1 // pred_fallthru
      _
    // Predicated region
    $region50: #{tpu_custom_call.1} parent=1 // pred_check
      _
    $region51: #{tpu_custom_call.1} parent=1 // pred_check_branch
      %63 = sbr.rel (0) target = $region53
    $region52: #{tpu_custom_call.1} parent=1 // pred_region
      %64 = dma.done [#allocation6], 16
    $region53: #{tpu_custom_call.1} parent=1 // pred_fallthru
      _
    %v65 = vld [vmem:[%s10] sm:$0x1]
    %v67 = vlaneseq
    %v68 = vshrl.u32 %v67, 7
    %v69 = vsub.s32 0, %v68
    %v70 = vrot.slane %v65, %v69
    %vm72 = vcmask 76800
    %73 = vst.msk [vmem:[#allocation7] sm:$0xf] %vm72, %v70
    %74 = vst.msk [vmem:[#allocation7 + $0x4] sm:$0xf] %vm72, %v70
    %75 = vst.msk [vmem:[#allocation7 + $0x8] sm:$0xf] %vm72, %v70
    %76 = vst.msk [vmem:[#allocation7 + $0xc] sm:$0xf] %vm72, %v70
    %77 = vst.msk [vmem:[#allocation7 + $0x10] sm:$0xf] %vm72, %v70
    %78 = vst.msk [vmem:[#allocation7 + $0x14] sm:$0xf] %vm72, %v70
    // Predicated region
    $region54: #{tpu_custom_call.1} parent=1 // pred_check
      _
    $region55: #{tpu_custom_call.1} parent=1 // pred_check_branch
      %80 = sbr.rel (0) target = $region57
    $region56: #{tpu_custom_call.1} parent=1 // pred_region
      %s82 = ssub.s32 384, 384
      %83 = vsyncadd [#allocation4], %s82
      %s84 = sshll.u32 [#allocation7], 4
      %s85 = int_to_ptr.vmem [resolvable:$true] %s84
      %90 = dma.vmem_to_hbm [thread:$0]  %s85, 384, %s11, [#allocation4], 64, 64, 4
    $region57: #{tpu_custom_call.1} parent=1 // pred_fallthru
      _
    // Predicated region
    $region58: #{tpu_custom_call.1} parent=1 // pred_check
      _
    $region59: #{tpu_custom_call.1} parent=1 // pred_check_branch
      %92 = sbr.rel (0) target = $region61
    $region60: #{tpu_custom_call.1} parent=1 // pred_region
      %93 = dma.done [#allocation4], 384
    $region61: #{tpu_custom_call.1} parent=1 // pred_fallthru
      _
    %94 = vsyncpa [#allocation3], 1
    %95 = vsyncpa [#allocation6], 1
    %96 = vsyncpa [#allocation4], 1

</llo_original>
